<compile_context>
chip_gen: v7x
topology: tpu7x:2x2x1
jax: 0.10.0
libtpu: 0.0.40
codegen_flags: <defaults>
</compile_context>

<pallas_src>
import functools

import jax
import jax.numpy as jnp
from jax.experimental import pallas as pl
from jax.experimental.pallas import tpu as pltpu


def _round_up(x, m):
    return ((x + m - 1) // m) * m


def _actor_kernel(state_ref, w1_ref, b1_ref, w2_ref, b2_ref, wm_ref, bm_ref,
                  out_ref, *, max_action, is_continuous):
    # a = tanh(l1(state))   -- bf16 MXU matmul, f32 accumulate, f32 tanh
    a = jnp.tanh(
        jnp.dot(state_ref[...], w1_ref[...],
                preferred_element_type=jnp.float32) + b1_ref[...])
    # a = tanh(l2(a))
    a = jnp.tanh(
        jnp.dot(a.astype(w2_ref.dtype), w2_ref[...],
                preferred_element_type=jnp.float32) + b2_ref[...])
    # final linear (action head), lane-dense padded output
    z = jnp.dot(a.astype(wm_ref.dtype), wm_ref[...],
                preferred_element_type=jnp.float32) + bm_ref[...]
    if is_continuous:
        z = max_action * jnp.tanh(z)
    out_ref[...] = z.astype(out_ref.dtype)


def actor_forward(state, params, max_action=1.0, is_continuous=True,
                  tile_b=1024):
    """Continuous: returns (mean, std) of the Normal action distribution.
    Discrete:   returns logits of the Categorical distribution."""
    w1, b1, w2, b2, wm, bm, log_std = params
    B, S = state.shape
    A = wm.shape[1]

    # Lane-dense output: pad action dim up to a multiple of 128.
    A_pad = _round_up(A, 128)
    # Sublane-aligned batch tile; pad B up to a multiple of the tile.
    tile_b = _round_up(max(tile_b, 8), 8)
    TILE_B = min(tile_b, _round_up(B, 8))
    B_pad = _round_up(B, TILE_B)

    # bf16 inputs for the MXU (accumulation stays f32 in-kernel).
    state_p = state
    if B_pad != B:
        state_p = jnp.pad(state_p, ((0, B_pad - B), (0, 0)))
    state_p = state_p.astype(jnp.bfloat16)
    w1b = w1.astype(jnp.bfloat16)
    w2b = w2.astype(jnp.bfloat16)
    wm_p = jnp.pad(wm, ((0, 0), (0, A_pad - A))).astype(jnp.bfloat16)
    bm_p = jnp.pad(bm, ((0, 0), (0, A_pad - A))).astype(jnp.float32)
    b1f = b1.astype(jnp.float32)
    b2f = b2.astype(jnp.float32)

    def resident(arr):
        # Whole array, same block at every grid step -> stays VMEM-resident.
        return pl.BlockSpec(arr.shape, lambda i: (0,) * arr.ndim)

    kernel = functools.partial(_actor_kernel,
                               max_action=float(max_action),
                               is_continuous=is_continuous)

    out_p = pl.pallas_call(
        kernel,
        out_shape=jax.ShapeDtypeStruct((B_pad, A_pad), jnp.float32),
        grid=(B_pad // TILE_B,),
        in_specs=[
            pl.BlockSpec((TILE_B, S), lambda i: (i, 0)),   # state: batch-tiled
            resident(w1b), resident(b1f),
            resident(w2b), resident(b2f),
            resident(wm_p), resident(bm_p),
        ],
        out_specs=pl.BlockSpec((TILE_B, A_pad), lambda i: (i, 0)),
        compiler_params=pltpu.CompilerParams(
            dimension_semantics=("parallel",)),
    )(state_p, w1b, b1f, w2b, b2f, wm_p, bm_p)

    out = out_p[:B, :A]
    if is_continuous:
        mean = out
        # std is state-independent: computed outside the kernel, lazy broadcast.
        std = jnp.broadcast_to(jnp.exp(log_std.astype(jnp.float32)), (B, A))
        return mean, std
    return out  # Categorical logits
    # TODO(synk): sampling / log_prob of the torch.distributions object is done
    # by the caller from (mean, std) / logits; not part of this kernel.


def init_actor_params(key, state_dim, action_dim, hidden_width=64):
    """Deterministic synthetic init. Weights stored as (in, out)."""
    k1, k2, k3, k4, k5, k6 = jax.random.split(key, 6)
    scale = 0.1
    w1 = scale * jax.random.normal(k1, (state_dim, hidden_width), jnp.float32)
    b1 = scale * jax.random.normal(k2, (1, hidden_width), jnp.float32)
    w2 = scale * jax.random.normal(k3, (hidden_width, hidden_width), jnp.float32)
    b2 = scale * jax.random.normal(k4, (1, hidden_width), jnp.float32)
    wm = scale * jax.random.normal(k5, (hidden_width, action_dim), jnp.float32)
    bm = scale * jax.random.normal(k6, (1, action_dim), jnp.float32)
    log_std = jnp.zeros((1, action_dim), jnp.float32)  # nn.Parameter(zeros(1, A))
    return (w1, b1, w2, b2, wm, bm, log_std)


if __name__ == "__main__":
    key = jax.random.PRNGKey(0)
    kp, ks = jax.random.split(key)

    state_dim, action_dim, hidden_width = 16, 4, 64
    batch = 8
    max_action = 1.0

    params = init_actor_params(kp, state_dim, action_dim, hidden_width)
    state = jax.random.normal(ks, (batch, state_dim), jnp.float32)

    # --- continuous branch (Normal(mean, std)) ---
    mean, std = actor_forward(state, params, max_action=max_action,
                              is_continuous=True)
    jax.block_until_ready((mean, std))

    # --- discrete branch (Categorical(logits)) ---
    logits = actor_forward(state, params, is_continuous=False)
    jax.block_until_ready(logits)

    # reference check in plain f32 JAX (kernel uses bf16 matmul inputs,
    # so tolerance is loosened accordingly)
    w1, b1, w2, b2, wm, bm, log_std = params
    a = jnp.tanh(state @ w1 + b1)
    a = jnp.tanh(a @ w2 + b2)
    z_ref = a @ wm + bm
    mean_ref = max_action * jnp.tanh(z_ref)
    std_ref = jnp.broadcast_to(jnp.exp(log_std), mean_ref.shape)

    assert mean.shape == (batch, action_dim)
    assert std.shape == (batch, action_dim)
    assert logits.shape == (batch, action_dim)
    assert jnp.allclose(mean, mean_ref, atol=2e-2), "mean mismatch"
    assert jnp.allclose(std, std_ref, atol=1e-5), "std mismatch"
    assert jnp.allclose(logits, z_ref, atol=2e-2), "logits mismatch"

    print("KERNEL_OK")
</pallas_src>

<mosaic_0001>
module attributes {stable_mosaic.version = 11 : i64} {
  func.func @_actor_kernel(%arg0: i32, %arg1: memref<8x16xbf16, #tpu.memory_space<vmem>>, %arg2: memref<16x64xbf16, #tpu.memory_space<vmem>>, %arg3: memref<1x64xf32, #tpu.memory_space<vmem>>, %arg4: memref<64x64xbf16, #tpu.memory_space<vmem>>, %arg5: memref<1x64xf32, #tpu.memory_space<vmem>>, %arg6: memref<64x128xbf16, #tpu.memory_space<vmem>>, %arg7: memref<1x128xf32, #tpu.memory_space<vmem>>, %arg8: memref<8x128xf32, #tpu.memory_space<vmem>>) attributes {dimension_semantics = [#tpu.dimension_semantics<parallel>], iteration_bounds = array<i64: 1>, scalar_prefetch = 0 : i64, scratch_operands = 0 : i64, tpu.core_type = #tpu.core_type<tc>, window_params = [{transform_indices = @transform_0, window_bounds = array<i64: 8, 16>}, {pipeline_mode = #tpu.pipeline_mode<synchronous>, transform_indices = @transform_1, window_bounds = array<i64: 16, 64>}, {pipeline_mode = #tpu.pipeline_mode<synchronous>, transform_indices = @transform_2, window_bounds = array<i64: 1, 64>}, {pipeline_mode = #tpu.pipeline_mode<synchronous>, transform_indices = @transform_3, window_bounds = array<i64: 64, 64>}, {pipeline_mode = #tpu.pipeline_mode<synchronous>, transform_indices = @transform_4, window_bounds = array<i64: 1, 64>}, {pipeline_mode = #tpu.pipeline_mode<synchronous>, transform_indices = @transform_5, window_bounds = array<i64: 64, 128>}, {pipeline_mode = #tpu.pipeline_mode<synchronous>, transform_indices = @transform_6, window_bounds = array<i64: 1, 128>}, {transform_indices = @transform_7, window_bounds = array<i64: 8, 128>}]} {
    %c0 = arith.constant 0 : index
    %c0_0 = arith.constant 0 : index
    %0 = vector.load %arg1[%c0, %c0_0] : memref<8x16xbf16, #tpu.memory_space<vmem>>, vector<8x16xbf16>
    %c0_1 = arith.constant 0 : index
    %c0_2 = arith.constant 0 : index
    %1 = vector.load %arg2[%c0_1, %c0_2] : memref<16x64xbf16, #tpu.memory_space<vmem>>, vector<16x64xbf16>
    %cst = arith.constant dense<0.000000e+00> : vector<8x64xf32>
    %2 = tpu.matmul %0, %1, %cst {dimension_numbers = #tpu.dot_dimension_numbers<[1], [0], [0], [1], [0, 0, 1, 1], [], []>} : vector<8x16xbf16>, vector<16x64xbf16>, vector<8x64xf32> -> vector<8x64xf32>
    %c0_3 = arith.constant 0 : index
    %c0_4 = arith.constant 0 : index
    %3 = vector.load %arg3[%c0_3, %c0_4] : memref<1x64xf32, #tpu.memory_space<vmem>>, vector<1x64xf32>
    %4 = vector.broadcast %3 : vector<1x64xf32> to vector<8x64xf32>
    %5 = arith.addf %2, %4 : vector<8x64xf32>
    %6 = math.tanh %5 : vector<8x64xf32>
    %7 = arith.truncf %6 : vector<8x64xf32> to vector<8x64xbf16>
    %c0_5 = arith.constant 0 : index
    %c0_6 = arith.constant 0 : index
    %8 = vector.load %arg4[%c0_5, %c0_6] : memref<64x64xbf16, #tpu.memory_space<vmem>>, vector<64x64xbf16>
    %cst_7 = arith.constant dense<0.000000e+00> : vector<8x64xf32>
    %9 = tpu.matmul %7, %8, %cst_7 {dimension_numbers = #tpu.dot_dimension_numbers<[1], [0], [0], [1], [0, 0, 1, 1], [], []>} : vector<8x64xbf16>, vector<64x64xbf16>, vector<8x64xf32> -> vector<8x64xf32>
    %c0_8 = arith.constant 0 : index
    %c0_9 = arith.constant 0 : index
    %10 = vector.load %arg5[%c0_8, %c0_9] : memref<1x64xf32, #tpu.memory_space<vmem>>, vector<1x64xf32>
    %11 = vector.broadcast %10 : vector<1x64xf32> to vector<8x64xf32>
    %12 = arith.addf %9, %11 : vector<8x64xf32>
    %13 = math.tanh %12 : vector<8x64xf32>
    %14 = arith.truncf %13 : vector<8x64xf32> to vector<8x64xbf16>
    %c0_10 = arith.constant 0 : index
    %c0_11 = arith.constant 0 : index
    %15 = vector.load %arg6[%c0_10, %c0_11] : memref<64x128xbf16, #tpu.memory_space<vmem>>, vector<64x128xbf16>
    %cst_12 = arith.constant dense<0.000000e+00> : vector<8x128xf32>
    %16 = tpu.matmul %14, %15, %cst_12 {dimension_numbers = #tpu.dot_dimension_numbers<[1], [0], [0], [1], [0, 0, 1, 1], [], []>} : vector<8x64xbf16>, vector<64x128xbf16>, vector<8x128xf32> -> vector<8x128xf32>
    %c0_13 = arith.constant 0 : index
    %c0_14 = arith.constant 0 : index
    %17 = vector.load %arg7[%c0_13, %c0_14] : memref<1x128xf32, #tpu.memory_space<vmem>>, vector<1x128xf32>
    %18 = vector.broadcast %17 : vector<1x128xf32> to vector<8x128xf32>
    %19 = arith.addf %16, %18 : vector<8x128xf32>
    %20 = math.tanh %19 : vector<8x128xf32>
    %cst_15 = arith.constant 1.000000e+00 : f32
    %21 = vector.broadcast %cst_15 : f32 to vector<8x128xf32>
    %22 = arith.mulf %21, %20 : vector<8x128xf32>
    %c0_16 = arith.constant 0 : index
    %c0_17 = arith.constant 0 : index
    %23 = vector.load %arg8[%c0_16, %c0_17] : memref<8x128xf32, #tpu.memory_space<vmem>>, vector<8x128xf32>
    tpu.vector_store %arg8[%c0_16, %c0_17], %22 {strides = array<i32>} : memref<8x128xf32, #tpu.memory_space<vmem>>, vector<8x128xf32>,
    return
  }
  func.func @transform_0(%arg0: i32) -> (i32, i32) {
    %c0_i32 = arith.constant 0 : i32
    %c0_i32_0 = arith.constant 0 : i32
    return %arg0, %c0_i32 : i32, i32
  }
  func.func @transform_1(%arg0: i32) -> (i32, i32) {
    %c0_i32 = arith.constant 0 : i32
    %c0_i32_0 = arith.constant 0 : i32
    %c0_i32_1 = arith.constant 0 : i32
    return %c0_i32, %c0_i32_0 : i32, i32
  }
  func.func @transform_2(%arg0: i32) -> (i32, i32) {
    %c0_i32 = arith.constant 0 : i32
    %c0_i32_0 = arith.constant 0 : i32
    %c0_i32_1 = arith.constant 0 : i32
    return %c0_i32, %c0_i32_0 : i32, i32
  }
  func.func @transform_3(%arg0: i32) -> (i32, i32) {
    %c0_i32 = arith.constant 0 : i32
    %c0_i32_0 = arith.constant 0 : i32
    %c0_i32_1 = arith.constant 0 : i32
    return %c0_i32, %c0_i32_0 : i32, i32
  }
  func.func @transform_4(%arg0: i32) -> (i32, i32) {
    %c0_i32 = arith.constant 0 : i32
    %c0_i32_0 = arith.constant 0 : i32
    %c0_i32_1 = arith.constant 0 : i32
    return %c0_i32, %c0_i32_0 : i32, i32
  }
  func.func @transform_5(%arg0: i32) -> (i32, i32) {
    %c0_i32 = arith.constant 0 : i32
    %c0_i32_0 = arith.constant 0 : i32
    %c0_i32_1 = arith.constant 0 : i32
    return %c0_i32, %c0_i32_0 : i32, i32
  }
  func.func @transform_6(%arg0: i32) -> (i32, i32) {
    %c0_i32 = arith.constant 0 : i32
    %c0_i32_0 = arith.constant 0 : i32
    %c0_i32_1 = arith.constant 0 : i32
    return %c0_i32, %c0_i32_0 : i32, i32
  }
  func.func @transform_7(%arg0: i32) -> (i32, i32) {
    %c0_i32 = arith.constant 0 : i32
    %c0_i32_0 = arith.constant 0 : i32
    return %arg0, %c0_i32 : i32, i32
  }
}

</mosaic_0001>

<llo_original>
// kernel: tpu_custom_call.1
$region0: #{tpu_custom_call.1}
  #allocation0 [shape = 'u32[]', space=smem, size = 0x4, offset = 0x4, fixed_abs, tag = 'smem constant byte address 0x4 - core index']
  #allocation1 [shape = 'u32[144,128]{1,0:T(1,128)}', space=vmem, size = 0x12000, scoped, tag = 'internal scratch']
  %s0 = inlined_call_operand.hbm [shape: bf16[8,16], index: 0, kind: input, shape index: {}]
  %s1 = inlined_call_operand.hbm [shape: bf16[16,64], index: 1, kind: input, shape index: {}]
  %s2 = inlined_call_operand.vmem [shape: f32[1,64], index: 2, kind: input, shape index: {}]
  %s3 = inlined_call_operand.hbm [shape: bf16[64,64], index: 3, kind: input, shape index: {}]
  %s4 = inlined_call_operand.vmem [shape: f32[1,64], index: 4, kind: input, shape index: {}]
  %s5 = inlined_call_operand.hbm [shape: bf16[64,128], index: 5, kind: input, shape index: {}]
  %s6 = inlined_call_operand.vmem [shape: f32[1,128], index: 6, kind: input, shape index: {}]
  %s7 = inlined_call_operand.hbm [shape: f32[8,128], index: 7, kind: output, shape index: {}]
  %s8 = sld [smem:[#allocation0]]
  $region54: #{tpu_custom_call.1} parent=0
    _
  %s10 = ssub.s32 1, %s8
  %s11 = scalar_select 0, %s10, %s8
  $region1: #{tpu_custom_call.1} parent=0
    #allocation2 [shape = 'u8[2048]{0}', space=vmem, size = 0x800, scoped, tag = 'input window, operand 0, single buffered']
    #allocation3 [shape = 's32[1]{0}', space=sflag, size = 0x4, scoped, tag = 'scoped memory for tpu_custom_call.1']
    #allocation4 [shape = 's32[1]{0}', space=sflag, size = 0x4, scoped, tag = 'scoped memory for tpu_custom_call.1']
    #allocation5 [shape = 'u8[4096]{0}', space=vmem, size = 0x1000, scoped, tag = 'input window, operand 1, single buffered']
    #allocation6 [shape = 's32[1]{0}', space=sflag, size = 0x4, scoped, tag = 'scoped memory for tpu_custom_call.1']
    #allocation7 [shape = 'u8[16384]{0}', space=vmem, size = 0x4000, scoped, tag = 'input window, operand 3, single buffered']
    #allocation8 [shape = 'u8[16384]{0}', space=vmem, size = 0x4000, scoped, tag = 'input window, operand 5, single buffered']
    #allocation9 [shape = 's32[1]{0}', space=sflag, size = 0x4, scoped, tag = 'scoped memory for tpu_custom_call.1']
    #allocation10 [shape = 'u8[4096]{0}', space=vmem, size = 0x1000, scoped, tag = 'output window, operand 0, single buffered']
    %12 = vsyncpa [#allocation3], 0
    %13 = vsyncpa [#allocation6], 0
    %14 = vsyncpa [#allocation9], 0
    %15 = vsyncpa [#allocation4], 0
    // Predicated region
    $region2: #{tpu_custom_call.1} parent=1 // pred_check
      _
    $region3: #{tpu_custom_call.1} parent=1 // pred_check_branch
      %17 = sbr.rel (0) target = $region5
    $region4: #{tpu_custom_call.1} parent=1 // pred_region
      %s19 = ssub.s32 64, 64
      %20 = vsyncadd [#allocation3], %s19
      %s22 = sshll.u32 [#allocation2], 4
      %s23 = int_to_ptr.vmem [resolvable:$true] %s22
      %25 = dma.hbm_to_vmem [thread:$0]  %s0, 64, %s23, [#allocation3]
    $region5: #{tpu_custom_call.1} parent=1 // pred_fallthru
      _
    // Predicated region
    $region6: #{tpu_custom_call.1} parent=1 // pred_check
      _
    $region7: #{tpu_custom_call.1} parent=1 // pred_check_branch
      %27 = sbr.rel (0) target = $region9
    $region8: #{tpu_custom_call.1} parent=1 // pred_region
      %s29 = ssub.s32 128, 128
      %30 = vsyncadd [#allocation6], %s29
      %s31 = sshll.u32 [#allocation5], 4
      %s32 = int_to_ptr.vmem [resolvable:$true] %s31
      %37 = dma.hbm_to_vmem [thread:$0]  %s1, 128, %s32, [#allocation6], 64, 64, 4
    $region9: #{tpu_custom_call.1} parent=1 // pred_fallthru
      _
    // Predicated region
    $region10: #{tpu_custom_call.1} parent=1 // pred_check
      _
    $region11: #{tpu_custom_call.1} parent=1 // pred_check_branch
      %39 = sbr.rel (0) target = $region13
    $region12: #{tpu_custom_call.1} parent=1 // pred_region
      _
    $region13: #{tpu_custom_call.1} parent=1 // pred_fallthru
      _
    // Predicated region
    $region14: #{tpu_custom_call.1} parent=1 // pred_check
      _
    $region15: #{tpu_custom_call.1} parent=1 // pred_check_branch
      %41 = sbr.rel (0) target = $region17
    $region16: #{tpu_custom_call.1} parent=1 // pred_region
      %s43 = ssub.s32 512, 512
      %44 = vsyncadd [#allocation6], %s43
      %s45 = sshll.u32 [#allocation7], 4
      %s46 = int_to_ptr.vmem [resolvable:$true] %s45
      %51 = dma.hbm_to_vmem [thread:$0]  %s3, 512, %s46, [#allocation6], 64, 64, 4
    $region17: #{tpu_custom_call.1} parent=1 // pred_fallthru
      _
    // Predicated region
    $region18: #{tpu_custom_call.1} parent=1 // pred_check
      _
    $region19: #{tpu_custom_call.1} parent=1 // pred_check_branch
      %53 = sbr.rel (0) target = $region21
    $region20: #{tpu_custom_call.1} parent=1 // pred_region
      _
    $region21: #{tpu_custom_call.1} parent=1 // pred_fallthru
      _
    // Predicated region
    $region22: #{tpu_custom_call.1} parent=1 // pred_check
      _
    $region23: #{tpu_custom_call.1} parent=1 // pred_check_branch
      %55 = sbr.rel (0) target = $region25
    $region24: #{tpu_custom_call.1} parent=1 // pred_region
      %s57 = ssub.s32 512, 512
      %58 = vsyncadd [#allocation9], %s57
      %s59 = sshll.u32 [#allocation8], 4
      %s60 = int_to_ptr.vmem [resolvable:$true] %s59
      %65 = dma.hbm_to_vmem [thread:$0]  %s5, 512, %s60, [#allocation9], 64, 64, 4
    $region25: #{tpu_custom_call.1} parent=1 // pred_fallthru
      _
    // Predicated region
    $region26: #{tpu_custom_call.1} parent=1 // pred_check
      _
    $region27: #{tpu_custom_call.1} parent=1 // pred_check_branch
      %67 = sbr.rel (0) target = $region29
    $region28: #{tpu_custom_call.1} parent=1 // pred_region
      _
    $region29: #{tpu_custom_call.1} parent=1 // pred_fallthru
      _
    // Predicated region
    $region30: #{tpu_custom_call.1} parent=1 // pred_check
      _
    $region31: #{tpu_custom_call.1} parent=1 // pred_check_branch
      %69 = sbr.rel (0) target = $region33
    $region32: #{tpu_custom_call.1} parent=1 // pred_region
      %70 = dma.done [#allocation3], 64
    $region33: #{tpu_custom_call.1} parent=1 // pred_fallthru
      _
    // Predicated region
    $region34: #{tpu_custom_call.1} parent=1 // pred_check
      _
    $region35: #{tpu_custom_call.1} parent=1 // pred_check_branch
      %72 = sbr.rel (0) target = $region37
    $region36: #{tpu_custom_call.1} parent=1 // pred_region
      %73 = dma.done [#allocation6], 128
    $region37: #{tpu_custom_call.1} parent=1 // pred_fallthru
      _
    // Predicated region
    $region38: #{tpu_custom_call.1} parent=1 // pred_check
      _
    $region39: #{tpu_custom_call.1} parent=1 // pred_check_branch
      %75 = sbr.rel (0) target = $region41
    $region40: #{tpu_custom_call.1} parent=1 // pred_region
      %76 = dma.done [#allocation6], 512
    $region41: #{tpu_custom_call.1} parent=1 // pred_fallthru
      _
    // Predicated region
    $region42: #{tpu_custom_call.1} parent=1 // pred_check
      _
    $region43: #{tpu_custom_call.1} parent=1 // pred_check_branch
      %78 = sbr.rel (0) target = $region45
    $region44: #{tpu_custom_call.1} parent=1 // pred_region
      %79 = dma.done [#allocation9], 512
    $region45: #{tpu_custom_call.1} parent=1 // pred_fallthru
      _
    %v81 = vld [vmem:[#allocation2] sm:$0xf]
    %v82 = vld [vmem:[#allocation5] sm:$0xf]
    %v83 = vld [vmem:[#allocation5 + $0x4] sm:$0xf]
    %v84 = vld [vmem:[%s2] sm:$0x1]
    %v86 = vlaneseq
    %v87 = vshrl.u32 %v86, 7
    %v88 = vsub.s32 0, %v87
    %v89 = vrot.slane %v84, %v88
    %v93 = vunpack.c.l.b16 %v82
    %v94 = vunpack.c.l.b16 %v83
    %v95 = vpack.c.b16 %v94, %v93
    %vm97 = vcmask 130048
    %v99 = vsel %vm97, %v81, 0
    %101 = vmatprep.subr.bf16.mxu0 0
    %102 = vmatpush1.bf16.msra.mxu0 %v95
    %103 = vmatprep.subr.bf16.mxu0 0
    %104 = vmatpush1.bf16.msra.mxu0 0
    %105 = vmatprep.subr.bf16.mxu0 0
    %106 = vmatpush1.bf16.msra.mxu0 0
    %107 = vmatprep.subr.bf16.mxu0 0
    %108 = vmatpush1.bf16.msra.mxu0 0
    %109 = vmatprep.subr.bf16.mxu0 0
    %110 = vmatpush1.bf16.msra.mxu0 0
    %111 = vmatprep.subr.bf16.mxu0 0
    %112 = vmatpush1.bf16.msra.mxu0 0
    %113 = vmatprep.subr.bf16.mxu0 0
    %114 = vmatpush1.bf16.msra.mxu0 0
    %115 = vmatprep.subr.bf16.mxu0 0
    %116 = vmatpush1.bf16.msra.mxu0 0
    %117 = vmatprep.subr.bf16.mxu0 0
    %118 = vmatpush1.bf16.msra.mxu0 0
    %119 = vmatprep.subr.bf16.mxu0 0
    %120 = vmatpush1.bf16.msra.mxu0 0
    %121 = vmatprep.subr.bf16.mxu0 0
    %122 = vmatpush1.bf16.msra.mxu0 0
    %123 = vmatprep.subr.bf16.mxu0 0
    %124 = vmatpush1.bf16.msra.mxu0 0
    %125 = vmatprep.subr.bf16.mxu0 0
    %126 = vmatpush1.bf16.msra.mxu0 0
    %127 = vmatprep.subr.bf16.mxu0 0
    %128 = vmatpush1.bf16.msra.mxu0 0
    %129 = vmatprep.subr.bf16.mxu0 0
    %130 = vmatpush1.bf16.msra.mxu0 0
    %131 = vmatprep.subr.bf16.mxu0 0
    %132 = vmatpush1.bf16.msra.mxu0 0
    %133 = vmatprep.mubr.bf16.mxu0 0
    %134 = vmatmul.mubr.bf16.gmra.mrb[0].mxu0 %v99
    %v135 = vpop.f32.mrb[0].mxu0
    %v136 = vadd.f32 %v89, %v135
    %v137 = vpop.f32.mrb[0].mxu0
    %v138 = vpop.f32.mrb[0].mxu0
    %v139 = vpop.f32.mrb[0].mxu0
    %140 = vdwg.mxu0
    %v141 = vtanh.pop %v136
    %v142 = vpack.c.bf16 %v141, %v141
    %v143 = vld [vmem:[#allocation7] sm:$0xf]
    %v144 = vld [vmem:[#allocation7 + $0x4] sm:$0xf]
    %v145 = vld [vmem:[#allocation7 + $0x8] sm:$0xf]
    %v146 = vld [vmem:[#allocation7 + $0xc] sm:$0xf]
    %v147 = vld [vmem:[#allocation7 + $0x10] sm:$0xf]
    %v148 = vld [vmem:[#allocation7 + $0x14] sm:$0xf]
    %v149 = vld [vmem:[#allocation7 + $0x18] sm:$0xf]
    %v150 = vld [vmem:[#allocation7 + $0x1c] sm:$0xf]
    %v151 = vld [vmem:[%s4] sm:$0x1]
    %v153 = vlaneseq
    %v154 = vshrl.u32 %v153, 7
    %v155 = vsub.s32 0, %v154
    %v156 = vrot.slane %v151, %v155
    %v166 = vunpack.c.l.b16 %v143
    %v167 = vunpack.c.l.b16 %v144
    %v168 = vunpack.c.l.b16 %v145
    %v169 = vunpack.c.l.b16 %v146
    %v170 = vunpack.c.l.b16 %v147
    %v171 = vunpack.c.l.b16 %v148
    %v172 = vunpack.c.l.b16 %v149
    %v173 = vunpack.c.l.b16 %v150
    %v174 = vpack.c.b16 %v167, %v166
    %v175 = vpack.c.b16 %v169, %v168
    %v176 = vpack.c.b16 %v171, %v170
    %v177 = vpack.c.b16 %v173, %v172
    %vm182 = vcmask 523264
    %v184 = vsel %vm182, %v142, 0
    %186 = vmatprep.subr.bf16.mxu0 0
    %187 = vmatpush1.bf16.msra.mxu0 %v174
    %188 = vmatprep.subr.bf16.mxu0 0
    %189 = vmatpush1.bf16.msra.mxu0 %v175
    %190 = vmatprep.subr.bf16.mxu0 0
    %191 = vmatpush1.bf16.msra.mxu0 %v176
    %192 = vmatprep.subr.bf16.mxu0 0
    %193 = vmatpush1.bf16.msra.mxu0 %v177
    %194 = vmatprep.subr.bf16.mxu0 0
    %195 = vmatpush1.bf16.msra.mxu0 0
    %196 = vmatprep.subr.bf16.mxu0 0
    %197 = vmatpush1.bf16.msra.mxu0 0
    %198 = vmatprep.subr.bf16.mxu0 0
    %199 = vmatpush1.bf16.msra.mxu0 0
    %200 = vmatprep.subr.bf16.mxu0 0
    %201 = vmatpush1.bf16.msra.mxu0 0
    %202 = vmatprep.subr.bf16.mxu0 0
    %203 = vmatpush1.bf16.msra.mxu0 0
    %204 = vmatprep.subr.bf16.mxu0 0
    %205 = vmatpush1.bf16.msra.mxu0 0
    %206 = vmatprep.subr.bf16.mxu0 0
    %207 = vmatpush1.bf16.msra.mxu0 0
    %208 = vmatprep.subr.bf16.mxu0 0
    %209 = vmatpush1.bf16.msra.mxu0 0
    %210 = vmatprep.subr.bf16.mxu0 0
    %211 = vmatpush1.bf16.msra.mxu0 0
    %212 = vmatprep.subr.bf16.mxu0 0
    %213 = vmatpush1.bf16.msra.mxu0 0
    %214 = vmatprep.subr.bf16.mxu0 0
    %215 = vmatpush1.bf16.msra.mxu0 0
    %216 = vmatprep.subr.bf16.mxu0 0
    %217 = vmatpush1.bf16.msra.mxu0 0
    %218 = vmatprep.mubr.bf16.mxu0 0
    %219 = vmatmul.mubr.bf16.gmra.mrb[0].mxu0 %v184
    %v220 = vpop.f32.mrb[0].mxu0
    %v221 = vadd.f32 %v156, %v220
    %v222 = vpop.f32.mrb[0].mxu0
    %v223 = vpop.f32.mrb[0].mxu0
    %v224 = vpop.f32.mrb[0].mxu0
    %225 = vdwg.mxu0
    %v226 = vtanh.pop %v221
    %v227 = vpack.c.bf16 %v226, %v226
    %v228 = vld [vmem:[#allocation8] sm:$0xf]
    %v229 = vld [vmem:[#allocation8 + $0x4] sm:$0xf]
    %v230 = vld [vmem:[#allocation8 + $0x8] sm:$0xf]
    %v231 = vld [vmem:[#allocation8 + $0xc] sm:$0xf]
    %v232 = vld [vmem:[#allocation8 + $0x10] sm:$0xf]
    %v233 = vld [vmem:[#allocation8 + $0x14] sm:$0xf]
    %v234 = vld [vmem:[#allocation8 + $0x18] sm:$0xf]
    %v235 = vld [vmem:[#allocation8 + $0x1c] sm:$0xf]
    %v236 = vld [vmem:[%s6] sm:$0x1]
    %v238 = vlaneseq
    %v239 = vshrl.u32 %v238, 7
    %v240 = vsub.s32 0, %v239
    %v241 = vrot.slane %v236, %v240
    %v251 = vunpack.c.l.b16 %v228
    %v252 = vunpack.c.l.b16 %v229
    %v253 = vunpack.c.l.b16 %v230
    %v254 = vunpack.c.l.b16 %v231
    %v255 = vunpack.c.l.b16 %v232
    %v256 = vunpack.c.l.b16 %v233
    %v257 = vunpack.c.l.b16 %v234
    %v258 = vunpack.c.l.b16 %v235
    %v259 = vpack.c.b16 %v252, %v251
    %v260 = vpack.c.b16 %v254, %v253
    %v261 = vpack.c.b16 %v256, %v255
    %v262 = vpack.c.b16 %v258, %v257
    %v268 = vsel %vm182, %v227, 0
    %270 = vmatprep.subr.bf16.mxu0 0
    %271 = vmatpush1.bf16.msra.mxu0 %v259
    %272 = vmatprep.subr.bf16.mxu0 0
    %273 = vmatpush1.bf16.msra.mxu0 %v260
    %274 = vmatprep.subr.bf16.mxu0 0
    %275 = vmatpush1.bf16.msra.mxu0 %v261
    %276 = vmatprep.subr.bf16.mxu0 0
    %277 = vmatpush1.bf16.msra.mxu0 %v262
    %278 = vmatprep.subr.bf16.mxu0 0
    %279 = vmatpush1.bf16.msra.mxu0 0
    %280 = vmatprep.subr.bf16.mxu0 0
    %281 = vmatpush1.bf16.msra.mxu0 0
    %282 = vmatprep.subr.bf16.mxu0 0
    %283 = vmatpush1.bf16.msra.mxu0 0
    %284 = vmatprep.subr.bf16.mxu0 0
    %285 = vmatpush1.bf16.msra.mxu0 0
    %286 = vmatprep.subr.bf16.mxu0 0
    %287 = vmatpush1.bf16.msra.mxu0 0
    %288 = vmatprep.subr.bf16.mxu0 0
    %289 = vmatpush1.bf16.msra.mxu0 0
    %290 = vmatprep.subr.bf16.mxu0 0
    %291 = vmatpush1.bf16.msra.mxu0 0
    %292 = vmatprep.subr.bf16.mxu0 0
    %293 = vmatpush1.bf16.msra.mxu0 0
    %294 = vmatprep.subr.bf16.mxu0 0
    %295 = vmatpush1.bf16.msra.mxu0 0
    %296 = vmatprep.subr.bf16.mxu0 0
    %297 = vmatpush1.bf16.msra.mxu0 0
    %298 = vmatprep.subr.bf16.mxu0 0
    %299 = vmatpush1.bf16.msra.mxu0 0
    %300 = vmatprep.subr.bf16.mxu0 0
    %301 = vmatpush1.bf16.msra.mxu0 0
    %302 = vmatprep.mubr.bf16.mxu0 0
    %303 = vmatmul.mubr.bf16.gmra.mrb[0].mxu0 %v268
    %v304 = vpop.f32.mrb[0].mxu0
    %v305 = vadd.f32 %v241, %v304
    %v306 = vpop.f32.mrb[0].mxu0
    %v307 = vpop.f32.mrb[0].mxu0
    %v308 = vpop.f32.mrb[0].mxu0
    %309 = vdwg.mxu0
    %v310 = vtanh.pop %v305
    %311 = vst [vmem:[#allocation10] sm:$0xff] %v310
    // Predicated region
    $region46: #{tpu_custom_call.1} parent=1 // pred_check
      _
    $region47: #{tpu_custom_call.1} parent=1 // pred_check_branch
      %313 = sbr.rel (0) target = $region49
    $region48: #{tpu_custom_call.1} parent=1 // pred_region
      %s315 = ssub.s32 128, 128
      %316 = vsyncadd [#allocation4], %s315
      %s318 = sshll.u32 [#allocation10], 4
      %s319 = int_to_ptr.vmem [resolvable:$true] %s318
      %321 = dma.vmem_to_hbm [thread:$0]  %s319, 128, %s7, [#allocation4]
    $region49: #{tpu_custom_call.1} parent=1 // pred_fallthru
      _
    // Predicated region
    $region50: #{tpu_custom_call.1} parent=1 // pred_check
      _
    $region51: #{tpu_custom_call.1} parent=1 // pred_check_branch
      %323 = sbr.rel (0) target = $region53
    $region52: #{tpu_custom_call.1} parent=1 // pred_region
      %324 = dma.done [#allocation4], 128
    $region53: #{tpu_custom_call.1} parent=1 // pred_fallthru
      _
    %325 = vsyncpa [#allocation3], 1
    %326 = vsyncpa [#allocation6], 1
    %327 = vsyncpa [#allocation9], 1
    %328 = vsyncpa [#allocation4], 1

</llo_original>
